<compile_context>
chip_gen: v5e
topology: v5e:2x2
jax: 0.10.0
libtpu: 0.0.40
codegen_flags: <defaults>
</compile_context>

<pallas_src>
import numpy as np
import jax
import jax.numpy as jnp
from jax.experimental import pallas as pl
from jax.experimental.pallas import tpu as pltpu


def _interp_matrix(n_in: int, n_out: int) -> np.ndarray:
    """Bilinear interpolation matrix (n_out, n_in), align_corners=True."""
    A = np.zeros((n_out, n_in), dtype=np.float32)
    if n_in == 1:
        A[:, 0] = 1.0
        return A
    for i in range(n_out):
        src = i * (n_in - 1) / (n_out - 1)
        i0 = int(np.floor(src))
        i1 = min(i0 + 1, n_in - 1)
        frac = src - i0
        A[i, i0] += 1.0 - frac
        A[i, i1] += frac
    return A


def decoder_kernel(x1_ref, kT_ref, x2_ref, w_ref, bias_ref, o_ref):
    # x1_ref  : (B*C,  H*W)   bf16  flattened low-res input (invariant, 1-buffered)
    # kT_ref  : (H*W,  T)     bf16  column tile of kron(A_h, A_w)^T
    # x2_ref  : (B*C,  T)     bf16  column tile of the flattened skip connection
    # w_ref   : (B*OC, B*C)   bf16  block-diag folded conv weight (invariant)
    # bias_ref: (B*OC, T)     f32   lane-dense folded BN shift (invariant)
    # o_ref   : (B*OC, T)     f32

    # Bilinear 2x upsample for every (batch, channel) row as one MXU matmul;
    # add the skip connection (VPU) in f32.
    up = jnp.dot(x1_ref[...], kT_ref[...], preferred_element_type=jnp.float32)
    xs = (up + x2_ref[...].astype(jnp.float32)).astype(jnp.bfloat16)

    # 1x1 conv (+ folded BN scale) for the whole batch via the block-diagonal
    # weight; fused bias + ReLU epilogue in f32.
    conv = jnp.dot(w_ref[...], xs, preferred_element_type=jnp.float32)
    o_ref[...] = jnp.maximum(conv + bias_ref[...], 0.0)


def decoder_forward(x1, x2, w_conv, bn_scale, bn_shift):
    B, C, H, W = x1.shape
    OC = w_conv.shape[0]
    H2, W2 = 2 * H, 2 * W
    assert x2.shape == (B, C, H2, W2)
    HW, HW2 = H * W, H2 * W2

    # Lane-dense column tiling of the output spatial axis (>=2 tiles so both
    # v7x TensorCores have work; falls back to a single tile if HW2 is small).
    tile = 128 if (HW2 % 128 == 0 and HW2 > 128) else HW2
    n_tiles = HW2 // tile

    # Host-side constants.
    ah = _interp_matrix(H, H2)                                   # (2H, H)
    aw = _interp_matrix(W, W2)                                   # (2W, W)
    kT = jnp.asarray(np.kron(ah, aw).T, dtype=jnp.bfloat16)      # (H*W, 2H*2W)

    # Fold BatchNorm scale into the conv weights; replicate block-diagonally
    # over the batch so the whole batch is one matmul.
    w_folded = w_conv * bn_scale[:, None]                        # (OC, C)
    w_bd = jnp.kron(jnp.eye(B, dtype=jnp.float32),
                    w_folded.astype(jnp.float32)).astype(jnp.bfloat16)  # (B*OC, B*C)

    # Lane-dense bias tile (identical for every column tile).
    bias_bc = jnp.broadcast_to(
        jnp.tile(bn_shift.astype(jnp.float32), B)[:, None], (B * OC, tile))

    # Flatten batch+channel rows, spatial lanes; cast activations to bf16.
    x1_flat = x1.reshape(B * C, HW).astype(jnp.bfloat16)
    x2_flat = x2.reshape(B * C, HW2).astype(jnp.bfloat16)

    out_flat = pl.pallas_call(
        decoder_kernel,
        out_shape=jax.ShapeDtypeStruct((B * OC, HW2), jnp.float32),
        grid_spec=pltpu.PrefetchScalarGridSpec(
            num_scalar_prefetch=0,
            grid=(n_tiles,),
            in_specs=[
                # Invariant operands: constant index map + single buffer.
                pl.BlockSpec((B * C, HW), lambda t: (0, 0),
                             pipeline_mode=pl.Buffered(1)),        # x1 (flattened)
                # Column-tiled operands (vary per grid step).
                pl.BlockSpec((HW, tile), lambda t: (0, t)),         # kron interp tile
                pl.BlockSpec((B * C, tile), lambda t: (0, t)),      # x2 tile
                # Invariant weight / bias.
                pl.BlockSpec((B * OC, B * C), lambda t: (0, 0),
                             pipeline_mode=pl.Buffered(1)),        # block-diag weight
                pl.BlockSpec((B * OC, tile), lambda t: (0, 0),
                             pipeline_mode=pl.Buffered(1)),        # lane-dense bias
            ],
            out_specs=pl.BlockSpec((B * OC, tile), lambda t: (0, t)),
        ),
        compiler_params=pltpu.CompilerParams(dimension_semantics=("parallel",)),
    )(x1_flat, kT, x2_flat, w_bd, bias_bc)

    return out_flat.reshape(B, OC, H2, W2)


if __name__ == "__main__":
    B, IN_CH, OUT_CH, H, W = 2, 4, 8, 8, 8
    key = jax.random.PRNGKey(0)
    k1, k2, k3, k4, k5, k6, k7 = jax.random.split(key, 7)

    x1 = jax.random.normal(k1, (B, IN_CH, H, W), jnp.float32)
    x2 = jax.random.normal(k2, (B, IN_CH, 2 * H, 2 * W), jnp.float32)

    # Deterministic synthetic parameters (Conv2d 1x1 no-bias weight + BatchNorm2d).
    w_conv = jax.random.normal(k3, (OUT_CH, IN_CH), jnp.float32) * 0.2      # (OC, C)
    gamma = 1.0 + 0.1 * jax.random.normal(k4, (OUT_CH,), jnp.float32)
    beta = 0.1 * jax.random.normal(k5, (OUT_CH,), jnp.float32)
    running_mean = 0.1 * jax.random.normal(k6, (OUT_CH,), jnp.float32)
    running_var = jax.nn.softplus(jax.random.normal(k7, (OUT_CH,), jnp.float32)) + 0.5
    eps = 1e-5
    inv_std = gamma / jnp.sqrt(running_var + eps)
    bn_scale = inv_std                                  # (OC,)
    bn_shift = beta - running_mean * inv_std            # (OC,)

    out = jax.block_until_ready(decoder_forward(x1, x2, w_conv, bn_scale, bn_shift))

    # Pure-JAX f32 reference with identical math for verification.
    ah = jnp.asarray(_interp_matrix(H, 2 * H))
    aw = jnp.asarray(_interp_matrix(W, 2 * W))
    up = jnp.einsum("ph,bchw->bcpw", ah, x1)
    up = jnp.einsum("bcpw,qw->bcpq", up, aw)
    xsum = up + x2
    ref = jnp.einsum("oc,bchw->bohw", w_conv, xsum)
    ref = ref * bn_scale[None, :, None, None] + bn_shift[None, :, None, None]
    ref = jnp.maximum(ref, 0.0)

    assert out.shape == (B, OUT_CH, 2 * H, 2 * W)
    # bf16 operands with f32 accumulation -> tolerance loosened vs the f32 reference.
    assert jnp.allclose(out, ref, atol=5e-2, rtol=5e-2), "mismatch vs reference"
    print("KERNEL_OK")
</pallas_src>

<mosaic_0001>
module attributes {stable_mosaic.version = 11 : i64} {
  func.func @decoder_kernel(%arg0: i32, %arg1: memref<8x64xbf16, #tpu.memory_space<vmem>>, %arg2: memref<64x128xbf16, #tpu.memory_space<vmem>>, %arg3: memref<8x128xbf16, #tpu.memory_space<vmem>>, %arg4: memref<16x8xbf16, #tpu.memory_space<vmem>>, %arg5: memref<16x128xf32, #tpu.memory_space<vmem>>, %arg6: memref<16x128xf32, #tpu.memory_space<vmem>>) attributes {dimension_semantics = [#tpu.dimension_semantics<parallel>], iteration_bounds = array<i64: 2>, scalar_prefetch = 0 : i64, scratch_operands = 0 : i64, tpu.core_type = #tpu.core_type<tc>, window_params = [{pipeline_mode = #tpu.pipeline_mode<synchronous>, transform_indices = @transform_0, window_bounds = array<i64: 8, 64>}, {transform_indices = @transform_1, window_bounds = array<i64: 64, 128>}, {transform_indices = @transform_2, window_bounds = array<i64: 8, 128>}, {pipeline_mode = #tpu.pipeline_mode<synchronous>, transform_indices = @transform_3, window_bounds = array<i64: 16, 8>}, {pipeline_mode = #tpu.pipeline_mode<synchronous>, transform_indices = @transform_4, window_bounds = array<i64: 16, 128>}, {transform_indices = @transform_5, window_bounds = array<i64: 16, 128>}]} {
    %c0 = arith.constant 0 : index
    %c0_0 = arith.constant 0 : index
    %0 = vector.load %arg1[%c0, %c0_0] : memref<8x64xbf16, #tpu.memory_space<vmem>>, vector<8x64xbf16>
    %c0_1 = arith.constant 0 : index
    %c0_2 = arith.constant 0 : index
    %1 = vector.load %arg2[%c0_1, %c0_2] : memref<64x128xbf16, #tpu.memory_space<vmem>>, vector<64x128xbf16>
    %cst = arith.constant dense<0.000000e+00> : vector<8x128xf32>
    %2 = tpu.matmul %0, %1, %cst {dimension_numbers = #tpu.dot_dimension_numbers<[1], [0], [0], [1], [0, 0, 1, 1], [], []>} : vector<8x64xbf16>, vector<64x128xbf16>, vector<8x128xf32> -> vector<8x128xf32>
    %c0_3 = arith.constant 0 : index
    %c0_4 = arith.constant 0 : index
    %3 = vector.load %arg3[%c0_3, %c0_4] : memref<8x128xbf16, #tpu.memory_space<vmem>>, vector<8x128xbf16>
    %4 = arith.extf %3 : vector<8x128xbf16> to vector<8x128xf32>
    %5 = arith.addf %2, %4 : vector<8x128xf32>
    %6 = arith.truncf %5 : vector<8x128xf32> to vector<8x128xbf16>
    %c0_5 = arith.constant 0 : index
    %c0_6 = arith.constant 0 : index
    %7 = vector.load %arg4[%c0_5, %c0_6] : memref<16x8xbf16, #tpu.memory_space<vmem>>, vector<16x8xbf16>
    %cst_7 = arith.constant dense<0.000000e+00> : vector<16x128xf32>
    %8 = tpu.matmul %7, %6, %cst_7 {dimension_numbers = #tpu.dot_dimension_numbers<[1], [0], [0], [1], [0, 0, 1, 1], [], []>} : vector<16x8xbf16>, vector<8x128xbf16>, vector<16x128xf32> -> vector<16x128xf32>
    %c0_8 = arith.constant 0 : index
    %c0_9 = arith.constant 0 : index
    %9 = vector.load %arg5[%c0_8, %c0_9] : memref<16x128xf32, #tpu.memory_space<vmem>>, vector<16x128xf32>
    %10 = arith.addf %8, %9 : vector<16x128xf32>
    %cst_10 = arith.constant 0.000000e+00 : f32
    %11 = vector.broadcast %cst_10 : f32 to vector<16x128xf32>
    %12 = arith.maximumf %10, %11 : vector<16x128xf32>
    %c0_11 = arith.constant 0 : index
    %c0_12 = arith.constant 0 : index
    %13 = vector.load %arg6[%c0_11, %c0_12] : memref<16x128xf32, #tpu.memory_space<vmem>>, vector<16x128xf32>
    tpu.vector_store %arg6[%c0_11, %c0_12], %12 {strides = array<i32>} : memref<16x128xf32, #tpu.memory_space<vmem>>, vector<16x128xf32>,
    return
  }
  func.func @transform_0(%arg0: i32) -> (i32, i32) {
    %c0_i32 = arith.constant 0 : i32
    %c0_i32_0 = arith.constant 0 : i32
    %c0_i32_1 = arith.constant 0 : i32
    return %c0_i32, %c0_i32_0 : i32, i32
  }
  func.func @transform_1(%arg0: i32) -> (i32, i32) {
    %c0_i32 = arith.constant 0 : i32
    %c0_i32_0 = arith.constant 0 : i32
    return %c0_i32, %arg0 : i32, i32
  }
  func.func @transform_2(%arg0: i32) -> (i32, i32) {
    %c0_i32 = arith.constant 0 : i32
    %c0_i32_0 = arith.constant 0 : i32
    return %c0_i32, %arg0 : i32, i32
  }
  func.func @transform_3(%arg0: i32) -> (i32, i32) {
    %c0_i32 = arith.constant 0 : i32
    %c0_i32_0 = arith.constant 0 : i32
    %c0_i32_1 = arith.constant 0 : i32
    return %c0_i32, %c0_i32_0 : i32, i32
  }
  func.func @transform_4(%arg0: i32) -> (i32, i32) {
    %c0_i32 = arith.constant 0 : i32
    %c0_i32_0 = arith.constant 0 : i32
    %c0_i32_1 = arith.constant 0 : i32
    return %c0_i32, %c0_i32_0 : i32, i32
  }
  func.func @transform_5(%arg0: i32) -> (i32, i32) {
    %c0_i32 = arith.constant 0 : i32
    %c0_i32_0 = arith.constant 0 : i32
    return %c0_i32, %arg0 : i32, i32
  }
}

</mosaic_0001>

<llo_original>
// kernel: tpu_custom_call.1
$region0: #{tpu_custom_call.1}
  #allocation0 [shape = 'u32[]', space=smem, size = 0x4, offset = 0x4, fixed_abs, tag = 'smem constant byte address 0x4 - core index']
  #allocation1 [shape = 'u32[72,128]{1,0:T(1,128)}', space=vmem, size = 0x9000, scoped, tag = 'internal scratch']
  %s0 = inlined_call_operand.vmem [shape: bf16[8,64], index: 0, kind: input, shape index: {}]
  %s1 = inlined_call_operand.hbm [shape: bf16[64,256], index: 1, kind: input, shape index: {}]
  %s2 = inlined_call_operand.vmem [shape: bf16[8,256], index: 2, kind: input, shape index: {}]
  %s3 = inlined_call_operand.vmem [shape: bf16[16,8], index: 3, kind: input, shape index: {}]
  %s4 = inlined_call_operand.hbm [shape: f32[16,128], index: 4, kind: input, shape index: {}]
  %s5 = inlined_call_operand.hbm [shape: f32[16,256], index: 5, kind: output, shape index: {}]
  %s6 = sld [smem:[#allocation0]]
  $region61: #{tpu_custom_call.1} parent=0
    _
  %s8 = ssub.s32 1, %s6
  %s9 = scalar_select 0, %s8, %s6
  $region1: #{tpu_custom_call.1} parent=0
    #allocation2 [shape = 'u8[32768]{0}', space=vmem, size = 0x8000, scoped, tag = 'input window, operand 1']
    #allocation3 [shape = 's32[2]{0}', space=sflag, size = 0x8, scoped, tag = 'scoped memory for tpu_custom_call.1']
    #allocation4 [shape = 's32[2]{0}', space=sflag, size = 0x8, scoped, tag = 'scoped memory for tpu_custom_call.1']
    #allocation5 [shape = 'u8[8192]{0}', space=vmem, size = 0x2000, scoped, tag = 'input window, operand 4, single buffered']
    #allocation6 [shape = 's32[1]{0}', space=sflag, size = 0x4, scoped, tag = 'scoped memory for tpu_custom_call.1']
    #allocation7 [shape = 'u8[16384]{0}', space=vmem, size = 0x4000, scoped, tag = 'output window, operand 0']
    %10 = vsyncpa [#allocation3], 0
    %s11 = scalar_lea.sflag [#allocation3], 1
    %12 = vsyncpa %s11, 0
    %13 = vsyncpa [#allocation6], 0
    %14 = vsyncpa [#allocation4], 0
    %s15 = scalar_lea.sflag [#allocation4], 1
    %16 = vsyncpa %s15, 0
    loop: start=0, step=1, limit=4
    $region2: #{tpu_custom_call.1} parent=1 // loop_pre_header
      _
    $region3: #{tpu_custom_call.1} parent=1 // loop_header
      %s18 = sphi 0, %s22
      %p19 = scmp.ge.s32.totalorder %s18, 4
      %s26 = sphi 0, %s26
      %s28 = sphi 0, %s26
      %s29 = sphi 0, %s28
      %s43 = sphi 0, %s29
      %s49 = sphi 0, %s51
      %s52 = sphi 0, %s49
      %s53 = sphi 0, %s52
      %s69 = sphi 0, %s53
      %s75 = sphi 0, %s77
      %s78 = sphi 0, %s75
      %s79 = sphi 0, %s78
      %s95 = sphi 0, %s79
      %s99 = sphi 0, %s99
      %s101 = sphi 0, %s99
      %s102 = sphi 0, %s101
      %s116 = sphi 0, %s102
      %s120 = sphi 0, %s120
      %s122 = sphi 0, %s120
      %s123 = sphi 0, %s122
      %s137 = sphi 0, %s123
      %s143 = sphi 0, %s145
      %s146 = sphi 0, %s143
      %s147 = sphi 0, %s146
      %s163 = sphi 0, %s147
    $region4: #{tpu_custom_call.1} parent=1 // loop_header_branch
      %21 = sbr.rel (%p19) target = $region8
    $region5: #{tpu_custom_call.1} parent=1 // loop_body
      %s23 = ssub.s32 %s18, 1
      %s24 = ssub.s32 %s18, 2
      %s25 = sadd.s32 %s18, 1
      %s27 = sadd.s32 %s26, 1
      %p30 = scmp.eq.s32.totalorder %s18, 1
      %p31 = scmp.ne.s32.totalorder %s26, %s28
      %p32 = scmp.eq.s32.totalorder %s18, 0
      %p33 = por %p31, %p32
      %p34 = scmp.ne.s32.totalorder %s26, %s28
      %p35 = scmp.eq.s32.totalorder %s23, 1
      %p36 = por %p34, %p35
      %p37 = scmp.ne.s32.totalorder %s28, %s29
      %p38 = scmp.eq.s32.totalorder %s23, 0
      %p39 = por %p37, %p38
      %p40 = scmp.ne.s32.totalorder %s28, %s29
      %p41 = scmp.eq.s32.totalorder %s24, 1
      %p42 = por %p40, %p41
      %p44 = scmp.ne.s32.totalorder %s29, %s43
      %p45 = scmp.eq.s32.totalorder %s24, 0
      %p46 = por %p44, %p45
      %s47 = ssub.s32 %s18, %s25
      %p48 = scmp.eq.s32.totalorder %s47, 0
      %s50 = sadd.s32 %s49, 1
      %s51 = scalar_select %p48, %s49, %s50
      %p54 = pneg %p48
      %p55 = scmp.eq.s32.totalorder %s18, 1
      %p56 = por %p54, %p55
      %p57 = scmp.ne.s32.totalorder %s49, %s52
      %p58 = scmp.eq.s32.totalorder %s18, 0
      %p59 = por %p57, %p58
      %p60 = scmp.ne.s32.totalorder %s49, %s52
      %p61 = scmp.eq.s32.totalorder %s23, 1
      %p62 = por %p60, %p61
      %p63 = scmp.ne.s32.totalorder %s52, %s53
      %p64 = scmp.eq.s32.totalorder %s23, 0
      %p65 = por %p63, %p64
      %p66 = scmp.ne.s32.totalorder %s52, %s53
      %p67 = scmp.eq.s32.totalorder %s24, 1
      %p68 = por %p66, %p67
      %p70 = scmp.ne.s32.totalorder %s53, %s69
      %p71 = scmp.eq.s32.totalorder %s24, 0
      %p72 = por %p70, %p71
      %s73 = ssub.s32 %s18, %s25
      %p74 = scmp.eq.s32.totalorder %s73, 0
      %s76 = sadd.s32 %s75, 1
      %s77 = scalar_select %p74, %s75, %s76
      %p80 = pneg %p74
      %p81 = scmp.eq.s32.totalorder %s18, 1
      %p82 = por %p80, %p81
      %p83 = scmp.ne.s32.totalorder %s75, %s78
      %p84 = scmp.eq.s32.totalorder %s18, 0
      %p85 = por %p83, %p84
      %p86 = scmp.ne.s32.totalorder %s75, %s78
      %p87 = scmp.eq.s32.totalorder %s23, 1
      %p88 = por %p86, %p87
      %p89 = scmp.ne.s32.totalorder %s78, %s79
      %p90 = scmp.eq.s32.totalorder %s23, 0
      %p91 = por %p89, %p90
      %p92 = scmp.ne.s32.totalorder %s78, %s79
      %p93 = scmp.eq.s32.totalorder %s24, 1
      %p94 = por %p92, %p93
      %p96 = scmp.ne.s32.totalorder %s79, %s95
      %p97 = scmp.eq.s32.totalorder %s24, 0
      %p98 = por %p96, %p97
      %s100 = sadd.s32 %s99, 1
      %p103 = scmp.eq.s32.totalorder %s18, 1
      %p104 = scmp.ne.s32.totalorder %s99, %s101
      %p105 = scmp.eq.s32.totalorder %s18, 0
      %p106 = por %p104, %p105
      %p107 = scmp.ne.s32.totalorder %s99, %s101
      %p108 = scmp.eq.s32.totalorder %s23, 1
      %p109 = por %p107, %p108
      %p110 = scmp.ne.s32.totalorder %s101, %s102
      %p111 = scmp.eq.s32.totalorder %s23, 0
      %p112 = por %p110, %p111
      %p113 = scmp.ne.s32.totalorder %s101, %s102
      %p114 = scmp.eq.s32.totalorder %s24, 1
      %p115 = por %p113, %p114
      %p117 = scmp.ne.s32.totalorder %s102, %s116
      %p118 = scmp.eq.s32.totalorder %s24, 0
      %p119 = por %p117, %p118
      %s121 = sadd.s32 %s120, 1
      %p124 = scmp.eq.s32.totalorder %s18, 1
      %p125 = scmp.ne.s32.totalorder %s120, %s122
      %p126 = scmp.eq.s32.totalorder %s18, 0
      %p127 = por %p125, %p126
      %p128 = scmp.ne.s32.totalorder %s120, %s122
      %p129 = scmp.eq.s32.totalorder %s23, 1
      %p130 = por %p128, %p129
      %p131 = scmp.ne.s32.totalorder %s122, %s123
      %p132 = scmp.eq.s32.totalorder %s23, 0
      %p133 = por %p131, %p132
      %p134 = scmp.ne.s32.totalorder %s122, %s123
      %p135 = scmp.eq.s32.totalorder %s24, 1
      %p136 = por %p134, %p135
      %p138 = scmp.ne.s32.totalorder %s123, %s137
      %p139 = scmp.eq.s32.totalorder %s24, 0
      %p140 = por %p138, %p139
      %s141 = ssub.s32 %s18, %s25
      %p142 = scmp.eq.s32.totalorder %s141, 0
      %s144 = sadd.s32 %s143, 1
      %s145 = scalar_select %p142, %s143, %s144
      %p148 = pneg %p142
      %p149 = scmp.eq.s32.totalorder %s18, 1
      %p150 = por %p148, %p149
      %p151 = scmp.ne.s32.totalorder %s143, %s146
      %p152 = scmp.eq.s32.totalorder %s18, 0
      %p153 = por %p151, %p152
      %p154 = scmp.ne.s32.totalorder %s143, %s146
      %p155 = scmp.eq.s32.totalorder %s23, 1
      %p156 = por %p154, %p155
      %p157 = scmp.ne.s32.totalorder %s146, %s147
      %p158 = scmp.eq.s32.totalorder %s23, 0
      %p159 = por %p157, %p158
      %p160 = scmp.ne.s32.totalorder %s146, %s147
      %p161 = scmp.eq.s32.totalorder %s24, 1
      %p162 = por %p160, %p161
      %p164 = scmp.ne.s32.totalorder %s147, %s163
      %p165 = scmp.eq.s32.totalorder %s24, 0
      %p166 = por %p164, %p165
      %p167 = scmp.le.s32.totalorder 1, %s18
      %p168 = scmp.lt.s32.totalorder %s18, 3
      %p169 = pnand %p167, %p168
      %p170 = pneg %p169
      // Predicated region
      $region9: #{tpu_custom_call.1} parent=5 // pred_check
        _
      $region10: #{tpu_custom_call.1} parent=5 // pred_check_branch
        %172 = sbr.rel (%p169) target = $region12
      $region11: #{tpu_custom_call.1} parent=5 // pred_region
        %s173 = ssub.s32 %s18, 1
        // Predicated region
        $region13: #{tpu_custom_call.1} parent=11 // pred_check
          %p174 = pneg %p39
        $region14: #{tpu_custom_call.1} parent=11 // pred_check_branch
          %176 = sbr.rel (%p174) target = $region16
        $region15: #{tpu_custom_call.1} parent=11 // pred_region
          _
        $region16: #{tpu_custom_call.1} parent=11 // pred_fallthru
          _
        // Predicated region
        $region17: #{tpu_custom_call.1} parent=11 // pred_check
          %p177 = pneg %p112
        $region18: #{tpu_custom_call.1} parent=11 // pred_check_branch
          %179 = sbr.rel (%p177) target = $region20
        $region19: #{tpu_custom_call.1} parent=11 // pred_region
          _
        $region20: #{tpu_custom_call.1} parent=11 // pred_fallthru
          _
        // Predicated region
        $region21: #{tpu_custom_call.1} parent=11 // pred_check
          %p180 = pneg %p133
        $region22: #{tpu_custom_call.1} parent=11 // pred_check_branch
          %182 = sbr.rel (%p180) target = $region24
        $region23: #{tpu_custom_call.1} parent=11 // pred_region
          %184 = vsyncadd [#allocation6], 0
          %s185 = sshll.u32 %s4, 4
          %s186 = int_to_ptr.hbm [resolvable:$true] %s185
          %s187 = sshll.u32 [#allocation5], 4
          %s188 = int_to_ptr.vmem [resolvable:$true] %s187
          %193 = dma.hbm_to_vmem [thread:$0]  %s186, 256, %s188, [#allocation6], 128, 128, 8
        $region24: #{tpu_custom_call.1} parent=11 // pred_fallthru
          _
      $region12: #{tpu_custom_call.1} parent=5 // pred_fallthru
        _
      %p194 = scmp.lt.s32.totalorder %s18, 2
      // Predicated region
      $region25: #{tpu_custom_call.1} parent=5 // pred_check
        %p195 = pneg %p194
      $region26: #{tpu_custom_call.1} parent=5 // pred_check_branch
        %197 = sbr.rel (%p195) target = $region28
      $region27: #{tpu_custom_call.1} parent=5 // pred_region
        // Predicated region
        $region29: #{tpu_custom_call.1} parent=27 // pred_check
          %p198 = pneg %p59
        $region30: #{tpu_custom_call.1} parent=27 // pred_check_branch
          %200 = sbr.rel (%p198) target = $region32
        $region31: #{tpu_custom_call.1} parent=27 // pred_region
          %s201 = sand.u32 %s49, 1
          %s202 = scalar_lea.sflag [#allocation3], %s201
          %s203 = sand.u32 %s49, 1
          %s204 = smul.addr %s203, 32
          %s205 = scalar_lea.vmem [#allocation2], %s204
          %207 = vsyncadd %s202, 0
          %s208 = smul.addr %s18, 4
          %s209 = scalar_lea.hbm %s1, %s208
          %s210 = sshll.u32 %s209, 4
          %s211 = int_to_ptr.hbm [resolvable:$true] %s210
          %s212 = sshll.u32 %s205, 4
          %s213 = int_to_ptr.vmem [resolvable:$true] %s212
          %218 = dma.hbm_to_vmem [thread:$0]  %s211, 512, %s213, %s202, 128, 64, 4
        $region32: #{tpu_custom_call.1} parent=27 // pred_fallthru
          _
        // Predicated region
        $region33: #{tpu_custom_call.1} parent=27 // pred_check
          %p219 = pneg %p85
        $region34: #{tpu_custom_call.1} parent=27 // pred_check_branch
          %221 = sbr.rel (%p219) target = $region36
        $region35: #{tpu_custom_call.1} parent=27 // pred_region
          %p222 = scmp.lt.s32.totalorder %s18, 1
          %s223 = scalar_select %p222, %s18, 1
          %s224 = smul.addr %s223, 4
          %s225 = scalar_lea.vmem %s2, %s224
        $region36: #{tpu_custom_call.1} parent=27 // pred_fallthru
          _
      $region28: #{tpu_custom_call.1} parent=5 // pred_fallthru
        _
      %p226 = scmp.le.s32.totalorder 1, %s18
      %p227 = scmp.lt.s32.totalorder %s18, 3
      %p228 = pnand %p226, %p227
      %p229 = pneg %p228
      // Predicated region
      $region37: #{tpu_custom_call.1} parent=5 // pred_check
        _
      $region38: #{tpu_custom_call.1} parent=5 // pred_check_branch
        %231 = sbr.rel (%p228) target = $region40
      $region39: #{tpu_custom_call.1} parent=5 // pred_region
        %s232 = ssub.s32 %s18, 1
        %s233 = sand.u32 %s52, 1
        %s234 = scalar_lea.sflag [#allocation3], %s233
        %s235 = sand.u32 %s52, 1
        %s236 = smul.addr %s235, 32
        %s237 = scalar_lea.vmem [#allocation2], %s236
        // Predicated region
        $region41: #{tpu_custom_call.1} parent=39 // pred_check
          %p238 = pneg %p65
        $region42: #{tpu_custom_call.1} parent=39 // pred_check_branch
          %240 = sbr.rel (%p238) target = $region44
        $region43: #{tpu_custom_call.1} parent=39 // pred_region
          %242 = dma.done %s234, 512
        $region44: #{tpu_custom_call.1} parent=39 // pred_fallthru
          _
        // Predicated region
        $region45: #{tpu_custom_call.1} parent=39 // pred_check
          %p243 = pneg %p133
        $region46: #{tpu_custom_call.1} parent=39 // pred_check_branch
          %245 = sbr.rel (%p243) target = $region48
        $region47: #{tpu_custom_call.1} parent=39 // pred_region
          %247 = dma.done [#allocation6], 256
        $region48: #{tpu_custom_call.1} parent=39 // pred_fallthru
          _
        %p248 = pneg %p39
        %p249 = pneg %p36
        %s250 = sand.u32 %s52, 1
        %s251 = scalar_lea.sflag [#allocation3], %s250
        %s252 = sand.u32 %s52, 1
        %s253 = smul.addr %s252, 32
        %s254 = scalar_lea.vmem [#allocation2], %s253
        %p255 = pneg %p65
        %p256 = pneg %p62
        %p257 = scmp.lt.s32.totalorder %s23, 1
        %s258 = scalar_select %p257, %s23, 1
        %s259 = smul.addr %s258, 4
        %s260 = scalar_lea.vmem %s2, %s259
        %p261 = pneg %p91
        %p262 = pneg %p88
        %p263 = pneg %p112
        %p264 = pneg %p109
        %p265 = pneg %p133
        %p266 = pneg %p130
        %p267 = pneg %p159
        %p268 = pneg %p156
        %s269 = sand.u32 %s146, 1
        %s270 = scalar_lea.sflag [#allocation4], %s269
        %s271 = sand.u32 %s146, 1
        %s272 = smul.addr %s271, 16
        %s273 = scalar_lea.vmem [#allocation7], %s272
        %p274 = scmp.lt.s32.totalorder %s23, 1
        %s275 = scalar_select %p274, %s23, 1
        %s276 = smul.addr %s275, 4
        %s277 = scalar_lea.vmem %s2, %s276
        %v279 = vld [vmem:[%s0] sm:$0xf]
        %v280 = vld [vmem:[%s237] sm:$0xf]
        %v281 = vld [vmem:[%s237 + $0x4] sm:$0xf]
        %v282 = vld [vmem:[%s237 + $0x8] sm:$0xf]
        %v283 = vld [vmem:[%s237 + $0xc] sm:$0xf]
        %v284 = vld [vmem:[%s237 + $0x10] sm:$0xf]
        %v285 = vld [vmem:[%s237 + $0x14] sm:$0xf]
        %v286 = vld [vmem:[%s237 + $0x18] sm:$0xf]
        %v287 = vld [vmem:[%s237 + $0x1c] sm:$0xf]
        %v288 = vld [vmem:[%s277] sm:$0xf]
        %v289 = vunpack.c.l.bf16 %v288
        %v298 = vunpack.c.l.b16 %v280
        %v299 = vunpack.c.l.b16 %v281
        %v300 = vunpack.c.l.b16 %v282
        %v301 = vunpack.c.l.b16 %v283
        %v302 = vunpack.c.l.b16 %v284
        %v303 = vunpack.c.l.b16 %v285
        %v304 = vunpack.c.l.b16 %v286
        %v305 = vunpack.c.l.b16 %v287
        %v306 = vpack.c.b16 %v299, %v298
        %v307 = vpack.c.b16 %v301, %v300
        %v308 = vpack.c.b16 %v303, %v302
        %v309 = vpack.c.b16 %v305, %v304
        %vm314 = vcmask 523264
        %v316 = vsel %vm314, %v279, 0
        %318 = vmatpush.bf16.msra.mxu0 0
        %319 = vmatpush.bf16.msra.mxu0 0
        %320 = vmatpush.bf16.msra.mxu0 0
        %321 = vmatpush.bf16.msra.mxu0 0
        %322 = vmatpush.bf16.msra.mxu0 %v309
        %323 = vmatpush.bf16.msra.mxu0 %v308
        %324 = vmatpush.bf16.msra.mxu0 %v307
        %325 = vmatpush.bf16.msra.mxu0 %v306
        %326 = vmatmul.bf16.gmra.mxu0 %v316
        %v327 = vpop.f32.mrf.mxu0
        %v328 = vadd.f32 %v289, %v327
        %v329 = vpop.f32.mrf.mxu0
        %330 = vdwg.mxu0
        %v331 = vpack.c.bf16 %v328, %v328
        %v332 = vld [vmem:[%s3] sm:$0xf]
        %v333 = vld [vmem:[%s3 + $0x4] sm:$0xf]
        %v334 = vld [vmem:[#allocation5] sm:$0xff]
        %v335 = vld [vmem:[#allocation5 + $0x8] sm:$0xff]
        %v338 = vunpack.c.l.b16 %v332
        %v339 = vunpack.c.l.b16 %v333
        %v340 = vpack.c.b16 %v339, %v338
        %vm341 = vcmask 64512
        %v343 = vsel %vm341, %v340, 0
        %vm345 = vcmask 1043456
        %v347 = vsel %vm345, %v331, 0
        %349 = vmatpush.bf16.msra.mxu0 0
        %350 = vmatpush.bf16.msra.mxu0 0
        %351 = vmatpush.bf16.msra.mxu0 0
        %352 = vmatpush.bf16.msra.mxu0 0
        %353 = vmatpush.bf16.msra.mxu0 0
        %354 = vmatpush.bf16.msra.mxu0 0
        %355 = vmatpush.bf16.msra.mxu0 0
        %356 = vmatpush.bf16.msra.mxu0 %v347
        %357 = vmatmul.bf16.gmra.mxu0 %v343
        %v358 = vpop.f32.mrf.mxu0
        %v359 = vadd.f32 %v334, %v358
        %v360 = vpop.f32.mrf.mxu0
        %v361 = vadd.f32 %v335, %v360
        %362 = vdwg.mxu0
        %v363 = vmax.f32 %v359, 0.0
        %v364 = vmax.f32 %v361, 0.0
        %365 = vst [vmem:[%s273] sm:$0xff] %v363
        %366 = vst [vmem:[%s273 + $0x8] sm:$0xff] %v364
        %s367 = sand.u32 %s146, 1
        %s368 = scalar_lea.sflag [#allocation4], %s367
        %s369 = sand.u32 %s146, 1
        %s370 = smul.addr %s369, 16
        %s371 = scalar_lea.vmem [#allocation7], %s370
        // Predicated region
        $region49: #{tpu_custom_call.1} parent=39 // pred_check
          %p372 = pneg %p156
        $region50: #{tpu_custom_call.1} parent=39 // pred_check_branch
          %374 = sbr.rel (%p372) target = $region52
        $region51: #{tpu_custom_call.1} parent=39 // pred_region
          %376 = vsyncadd %s368, 0
          %s377 = smul.addr %s23, 8
          %s378 = scalar_lea.hbm %s5, %s377
          %s379 = sshll.u32 %s371, 4
          %s380 = int_to_ptr.vmem [resolvable:$true] %s379
          %s381 = sshll.u32 %s378, 4
          %s382 = int_to_ptr.hbm [resolvable:$true] %s381
          %387 = dma.vmem_to_hbm [thread:$0]  %s380, 256, %s382, %s368, 128, 256, 8
        $region52: #{tpu_custom_call.1} parent=39 // pred_fallthru
          _
      $region40: #{tpu_custom_call.1} parent=5 // pred_fallthru
        _
      %p388 = scmp.le.s32.totalorder 2, %s18
      // Predicated region
      $region53: #{tpu_custom_call.1} parent=5 // pred_check
        %p389 = pneg %p388
      $region54: #{tpu_custom_call.1} parent=5 // pred_check_branch
        %391 = sbr.rel (%p389) target = $region56
      $region55: #{tpu_custom_call.1} parent=5 // pred_region
        %s392 = ssub.s32 %s18, 2
        // Predicated region
        $region57: #{tpu_custom_call.1} parent=55 // pred_check
          %p393 = pneg %p162
        $region58: #{tpu_custom_call.1} parent=55 // pred_check_branch
          %395 = sbr.rel (%p393) target = $region60
        $region59: #{tpu_custom_call.1} parent=55 // pred_region
          %s396 = sand.u32 %s147, 1
          %s397 = scalar_lea.sflag [#allocation4], %s396
          %s398 = sand.u32 %s147, 1
          %s399 = smul.addr %s398, 16
          %s400 = scalar_lea.vmem [#allocation7], %s399
          %402 = dma.done %s397, 256
        $region60: #{tpu_custom_call.1} parent=55 // pred_fallthru
          _
      $region56: #{tpu_custom_call.1} parent=5 // pred_fallthru
        _
    $region6: #{tpu_custom_call.1} parent=1 // loop_footer
      %s22 = sadd.s32 1, %s18
    $region7: #{tpu_custom_call.1} parent=1 // loop_footer_branch
      %17 = sbr.rel target = $region3
    $region8: #{tpu_custom_call.1} parent=1 // loop_exit
      _
    %403 = vsyncpa [#allocation3], 1
    %s404 = scalar_lea.sflag [#allocation3], 1
    %405 = vsyncpa %s404, 1
    %406 = vsyncpa [#allocation6], 1
    %407 = vsyncpa [#allocation4], 1
    %s408 = scalar_lea.sflag [#allocation4], 1
    %409 = vsyncpa %s408, 1

</llo_original>
